<compile_context>
chip_gen: v7x
topology: tpu7x:2x2x1
jax: 0.10.0
libtpu: 0.0.40
codegen_flags: <defaults>
</compile_context>

<pallas_src>
import jax
import jax.numpy as jnp
from jax.experimental import pallas as pl
from jax.experimental.pallas import tpu as pltpu


SUBLANE = 8          # batch lives on the sublane axis -> 8-granule padding
BLOCK_B_MAX = 2048   # batch tile upper bound (VMEM blocks stay ~1 MiB each)


def _round_up(x, m):
    return ((x + m - 1) // m) * m


def _choose_block(b_pad):
    """Pick block_b: multiple of 8, divides b_pad, <= BLOCK_B_MAX, and
    (when possible) gives >= 2 grid steps so v7x megacore can split them."""
    units = b_pad // SUBLANE
    max_units = BLOCK_B_MAX // SUBLANE
    target = min(max_units, units)
    if units >= 2:
        target = min(target, (units + 1) // 2)   # at least 2 batch blocks
    d = target
    while units % d:
        d -= 1
    return d * SUBLANE, units // d


def game_kernel(x_ref, lab_ref, wt_ref, b_ref, logits_ref, stats_ref):
    """One batch tile in natural (batch-major) orientation.

      x_ref      : (BM, INPUT)   f32   streamed batch block (batch on sublanes)
      lab_ref    : (BM, 1)       i32   streamed labels
      wt_ref     : (INPUT, OUT)  f32   resident fused weight (w2 @ w1)^T
      b_ref      : (1, OUT)      f32   resident fused bias   (w2 @ b1 + b2)
      logits_ref : (BM, OUT)     f32 out  receiver logits
      stats_ref  : (BM, 2)       f32 out  col 0 = per-sample CE, col 1 = acc
    """
    x = x_ref[...]
    labels = lab_ref[...]                                    # (BM, 1) int32

    # ---- fused Sender+Receiver linear on the MXU ----
    logits = jnp.dot(x, wt_ref[...],
                     preferred_element_type=jnp.float32) + b_ref[...]
    logits_ref[...] = logits

    bm, out_sz = logits.shape

    # ---- cross-entropy (reduction="none"), numerically stable ----
    m = jnp.max(logits, axis=-1, keepdims=True)              # (BM, 1)
    lse = m + jnp.log(jnp.sum(jnp.exp(logits - m), axis=-1, keepdims=True))
    col = jax.lax.broadcasted_iota(jnp.int32, (bm, out_sz), 1)
    onehot = (col == labels).astype(jnp.float32)             # labels in [0, OUT)
    picked = jnp.sum(logits * onehot, axis=-1, keepdims=True)
    loss_col = lse - picked                                   # (BM, 1)

    # ---- accuracy: first-max index (torch.argmax semantics) == label ----
    is_max = logits == m
    first_idx = jnp.min(jnp.where(is_max, col, out_sz), axis=-1, keepdims=True)
    acc_col = (first_idx == labels).astype(jnp.float32)       # (BM, 1)

    sel = jax.lax.broadcasted_iota(jnp.int32, (bm, 2), 1)
    stats_ref[...] = jnp.where(sel == 0, loss_col, acc_col)   # (BM, 2)


@jax.jit
def game_forward(sender_input, labels, params):
    """Pure-JAX wrapper around the Pallas kernel.

    Returns (mean_loss, interaction_dict) mirroring Game.forward.
    """
    x = sender_input.astype(jnp.float32)
    B, input_sz = x.shape
    w1 = params["w1"].astype(jnp.float32)        # (HIDDEN, INPUT)
    b1 = params["b1"].astype(jnp.float32)        # (HIDDEN,)
    w2 = params["w2"].astype(jnp.float32)        # (OUTPUT, HIDDEN)
    b2 = params["b2"].astype(jnp.float32)        # (OUTPUT,)
    out_sz = w2.shape[0]

    # --- parameter glue: fuse the two linears (exact up to fp reassociation) ---
    wt = jnp.dot(w2, w1).T                       # (INPUT, OUTPUT)
    bias = (jnp.dot(w2, b1) + b2).reshape(1, out_sz)

    # --- batch padding only to sublane granularity (8) ---
    b_pad = _round_up(B, SUBLANE)
    if b_pad != B:
        x_p = jnp.zeros((b_pad, input_sz), jnp.float32).at[:B].set(x)
        lab_p = jnp.zeros((b_pad, 1), jnp.int32).at[:B, 0].set(
            labels.astype(jnp.int32))
    else:
        x_p = x
        lab_p = labels.astype(jnp.int32).reshape(B, 1)

    block_b, grid_b = _choose_block(b_pad)

    logits_p, stats = pl.pallas_call(
        game_kernel,
        out_shape=(
            jax.ShapeDtypeStruct((b_pad, out_sz), jnp.float32),  # logits
            jax.ShapeDtypeStruct((b_pad, 2), jnp.float32),       # [loss, acc]
        ),
        grid_spec=pltpu.PrefetchScalarGridSpec(
            num_scalar_prefetch=0,
            grid=(grid_b,),
            in_specs=[
                pl.BlockSpec((block_b, input_sz), lambda i: (i, 0)),  # x (streamed)
                pl.BlockSpec((block_b, 1), lambda i: (i, 0)),         # labels
                pl.BlockSpec((input_sz, out_sz), lambda i: (0, 0)),   # fused W^T (resident)
                pl.BlockSpec((1, out_sz), lambda i: (0, 0)),          # fused bias
            ],
            out_specs=(
                pl.BlockSpec((block_b, out_sz), lambda i: (i, 0)),
                pl.BlockSpec((block_b, 2), lambda i: (i, 0)),
            ),
        ),
        compiler_params=pltpu.CompilerParams(
            dimension_semantics=("parallel",),       # batch blocks independent
            vmem_limit_bytes=32 * 1024 * 1024),
    )(x_p, lab_p, wt, bias)

    logits = logits_p[:B]                        # no-op slice when B % 8 == 0
    per_loss = stats[:B, 0]
    acc = stats[:B, 1]
    mean_loss = jnp.mean(per_loss)

    interaction = {
        "receiver_output": logits,
        "loss": per_loss,
        "aux": {"acc": acc},
        "labels": labels,
        "sender_input": sender_input,
    }
    return mean_loss, interaction


def _reference(sender_input, labels, params):
    """Plain-JAX reference (two un-fused matmuls) for correctness checking."""
    msg = sender_input @ params["w1"].T + params["b1"]
    logits = msg @ params["w2"].T + params["b2"]
    lse = jax.scipy.special.logsumexp(logits, axis=-1)
    picked = jnp.take_along_axis(logits, labels[:, None], axis=-1)[:, 0]
    loss = lse - picked
    acc = (jnp.argmax(logits, axis=-1) == labels).astype(jnp.float32)
    return loss.mean(), loss, acc, logits


def _make_batch(key, batch, n):
    k_a, k_b = jax.random.split(key)
    a = jax.random.randint(k_a, (batch,), 0, n)
    b = jax.random.randint(k_b, (batch,), 0, n)
    sender_input = jnp.concatenate(
        [jax.nn.one_hot(a, n, dtype=jnp.float32),
         jax.nn.one_hot(b, n, dtype=jnp.float32)], axis=-1)    # (batch, 2n)
    labels = (a + b).astype(jnp.int32)                         # (batch,)
    return sender_input, labels


if __name__ == "__main__":
    # Addition game: two numbers in [0, N), one-hot concatenated; label = sum.
    N = 10
    INPUT = 2 * N          # 20
    HIDDEN = 32
    OUTPUT = 2 * N - 1     # 19 possible sums

    key = jax.random.PRNGKey(0)
    k_d1, k_d2, k_d3, k_w1, k_b1, k_w2, k_b2 = jax.random.split(key, 7)

    params = {
        "w1": jax.random.normal(k_w1, (HIDDEN, INPUT), jnp.float32) * 0.1,
        "b1": jax.random.normal(k_b1, (HIDDEN,), jnp.float32) * 0.01,
        "w2": jax.random.normal(k_w2, (OUTPUT, HIDDEN), jnp.float32) * 0.1,
        "b2": jax.random.normal(k_b2, (OUTPUT,), jnp.float32) * 0.01,
    }

    def check(batch, data_key):
        sender_input, labels = _make_batch(data_key, batch, N)
        mean_loss, inter = game_forward(sender_input, labels, params)
        jax.block_until_ready((mean_loss, inter))
        ref_mean, ref_loss, ref_acc, ref_logits = _reference(
            sender_input, labels, params)
        assert jnp.allclose(mean_loss, ref_mean, atol=1e-4), (mean_loss, ref_mean)
        assert jnp.allclose(inter["loss"], ref_loss, atol=1e-4)
        assert jnp.allclose(inter["aux"]["acc"], ref_acc)
        assert jnp.allclose(inter["receiver_output"], ref_logits, atol=1e-4)

    check(8, k_d1)      # tiny batch: single block, no padding
    check(600, k_d2)    # multiple of 8: zero padding waste, 3 blocks of 200
    check(20, k_d3)     # non-multiple of 8: exercises the sublane pad path

    print("KERNEL_OK")
</pallas_src>

<mosaic_0001>
module attributes {stable_mosaic.version = 11 : i64} {
  func.func @game_kernel(%arg0: i32, %arg1: memref<8x20xf32, #tpu.memory_space<vmem>>, %arg2: memref<8x1xi32, #tpu.memory_space<vmem>>, %arg3: memref<20x19xf32, #tpu.memory_space<vmem>>, %arg4: memref<1x19xf32, #tpu.memory_space<vmem>>, %arg5: memref<8x19xf32, #tpu.memory_space<vmem>>, %arg6: memref<8x2xf32, #tpu.memory_space<vmem>>) attributes {dimension_semantics = [#tpu.dimension_semantics<parallel>], iteration_bounds = array<i64: 1>, scalar_prefetch = 0 : i64, scratch_operands = 0 : i64, tpu.core_type = #tpu.core_type<tc>, window_params = [{transform_indices = @transform_0, window_bounds = array<i64: 8, 20>}, {transform_indices = @transform_1, window_bounds = array<i64: 8, 1>}, {pipeline_mode = #tpu.pipeline_mode<synchronous>, transform_indices = @transform_2, window_bounds = array<i64: 20, 19>}, {pipeline_mode = #tpu.pipeline_mode<synchronous>, transform_indices = @transform_3, window_bounds = array<i64: 1, 19>}, {transform_indices = @transform_4, window_bounds = array<i64: 8, 19>}, {transform_indices = @transform_5, window_bounds = array<i64: 8, 2>}]} {
    %c0 = arith.constant 0 : index
    %c0_0 = arith.constant 0 : index
    %0 = vector.load %arg1[%c0, %c0_0] : memref<8x20xf32, #tpu.memory_space<vmem>>, vector<8x20xf32>
    %c0_1 = arith.constant 0 : index
    %c0_2 = arith.constant 0 : index
    %1 = vector.load %arg2[%c0_1, %c0_2] : memref<8x1xi32, #tpu.memory_space<vmem>>, vector<8x1xi32>
    %c0_3 = arith.constant 0 : index
    %c0_4 = arith.constant 0 : index
    %2 = vector.load %arg3[%c0_3, %c0_4] : memref<20x19xf32, #tpu.memory_space<vmem>>, vector<20x19xf32>
    %cst = arith.constant dense<0.000000e+00> : vector<8x19xf32>
    %3 = tpu.matmul %0, %2, %cst {dimension_numbers = #tpu.dot_dimension_numbers<[1], [0], [0], [1], [0, 0, 1, 1], [], []>} : vector<8x20xf32>, vector<20x19xf32>, vector<8x19xf32> -> vector<8x19xf32>
    %c0_5 = arith.constant 0 : index
    %c0_6 = arith.constant 0 : index
    %4 = vector.load %arg4[%c0_5, %c0_6] : memref<1x19xf32, #tpu.memory_space<vmem>>, vector<1x19xf32>
    %5 = vector.broadcast %4 : vector<1x19xf32> to vector<8x19xf32>
    %6 = arith.addf %3, %5 : vector<8x19xf32>
    %c0_7 = arith.constant 0 : index
    %c0_8 = arith.constant 0 : index
    %7 = vector.load %arg5[%c0_7, %c0_8] : memref<8x19xf32, #tpu.memory_space<vmem>>, vector<8x19xf32>
    tpu.vector_store %arg5[%c0_7, %c0_8], %6 {strides = array<i32>} : memref<8x19xf32, #tpu.memory_space<vmem>>, vector<8x19xf32>,
    %cst_9 = arith.constant dense<0xFF800000> : vector<8xf32>
    %8 = vector.multi_reduction <maximumf>, %6, %cst_9 [1] : vector<8x19xf32> to vector<8xf32>
    %9 = vector.shape_cast %8 : vector<8xf32> to vector<8x1xf32>
    %10 = vector.broadcast %9 : vector<8x1xf32> to vector<8x19xf32>
    %11 = arith.subf %6, %10 : vector<8x19xf32>
    %12 = math.exp %11 : vector<8x19xf32>
    %cst_10 = arith.constant dense<0.000000e+00> : vector<8xf32>
    %13 = vector.multi_reduction <add>, %12, %cst_10 [1] : vector<8x19xf32> to vector<8xf32>
    %14 = vector.shape_cast %13 : vector<8xf32> to vector<8x1xf32>
    %15 = math.log %14 : vector<8x1xf32>
    %16 = arith.addf %9, %15 : vector<8x1xf32>
    %17 = tpu.iota {dimensions = array<i32: 1>} : vector<8x19xi32>
    %18 = vector.broadcast %1 : vector<8x1xi32> to vector<8x19xi32>
    %19 = arith.cmpi eq, %17, %18 : vector<8x19xi32>
    %20 = arith.extui %19 : vector<8x19xi1> to vector<8x19xi32>
    %21 = arith.sitofp %20 : vector<8x19xi32> to vector<8x19xf32>
    %22 = arith.mulf %6, %21 : vector<8x19xf32>
    %cst_11 = arith.constant dense<0.000000e+00> : vector<8xf32>
    %23 = vector.multi_reduction <add>, %22, %cst_11 [1] : vector<8x19xf32> to vector<8xf32>
    %24 = vector.shape_cast %23 : vector<8xf32> to vector<8x1xf32>
    %25 = arith.subf %16, %24 : vector<8x1xf32>
    %26 = vector.broadcast %9 : vector<8x1xf32> to vector<8x19xf32>
    %27 = arith.cmpf oeq, %6, %26 : vector<8x19xf32>
    %c19_i32 = arith.constant 19 : i32
    %28 = vector.broadcast %c19_i32 : i32 to vector<8x19xi32>
    %29 = arith.select %27, %17, %28 : vector<8x19xi1>, vector<8x19xi32>
    %cst_12 = arith.constant dense<2147483647> : vector<8xi32>
    %30 = vector.multi_reduction <minsi>, %29, %cst_12 [1] : vector<8x19xi32> to vector<8xi32>
    %31 = vector.shape_cast %30 : vector<8xi32> to vector<8x1xi32>
    %32 = arith.cmpi eq, %31, %1 : vector<8x1xi32>
    %33 = arith.extui %32 : vector<8x1xi1> to vector<8x1xi32>
    %34 = arith.sitofp %33 : vector<8x1xi32> to vector<8x1xf32>
    %35 = tpu.iota {dimensions = array<i32: 1>} : vector<8x2xi32>
    %c0_i32 = arith.constant 0 : i32
    %36 = vector.broadcast %c0_i32 : i32 to vector<8x2xi32>
    %37 = arith.cmpi eq, %35, %36 : vector<8x2xi32>
    %38 = vector.shape_cast %25 : vector<8x1xf32> to vector<8x1xf32>
    %39 = vector.broadcast %38 : vector<8x1xf32> to vector<8x2xf32>
    %40 = vector.shape_cast %34 : vector<8x1xf32> to vector<8x1xf32>
    %41 = vector.broadcast %40 : vector<8x1xf32> to vector<8x2xf32>
    %42 = arith.select %37, %39, %41 : vector<8x2xi1>, vector<8x2xf32>
    %c0_13 = arith.constant 0 : index
    %c0_14 = arith.constant 0 : index
    %43 = vector.load %arg6[%c0_13, %c0_14] : memref<8x2xf32, #tpu.memory_space<vmem>>, vector<8x2xf32>
    tpu.vector_store %arg6[%c0_13, %c0_14], %42 {strides = array<i32>} : memref<8x2xf32, #tpu.memory_space<vmem>>, vector<8x2xf32>,
    return
  }
  func.func @transform_0(%arg0: i32) -> (i32, i32) {
    %c0_i32 = arith.constant 0 : i32
    %c0_i32_0 = arith.constant 0 : i32
    return %arg0, %c0_i32 : i32, i32
  }
  func.func @transform_1(%arg0: i32) -> (i32, i32) {
    %c0_i32 = arith.constant 0 : i32
    %c0_i32_0 = arith.constant 0 : i32
    return %arg0, %c0_i32 : i32, i32
  }
  func.func @transform_2(%arg0: i32) -> (i32, i32) {
    %c0_i32 = arith.constant 0 : i32
    %c0_i32_0 = arith.constant 0 : i32
    %c0_i32_1 = arith.constant 0 : i32
    return %c0_i32, %c0_i32_0 : i32, i32
  }
  func.func @transform_3(%arg0: i32) -> (i32, i32) {
    %c0_i32 = arith.constant 0 : i32
    %c0_i32_0 = arith.constant 0 : i32
    %c0_i32_1 = arith.constant 0 : i32
    return %c0_i32, %c0_i32_0 : i32, i32
  }
  func.func @transform_4(%arg0: i32) -> (i32, i32) {
    %c0_i32 = arith.constant 0 : i32
    %c0_i32_0 = arith.constant 0 : i32
    return %arg0, %c0_i32 : i32, i32
  }
  func.func @transform_5(%arg0: i32) -> (i32, i32) {
    %c0_i32 = arith.constant 0 : i32
    %c0_i32_0 = arith.constant 0 : i32
    return %arg0, %c0_i32 : i32, i32
  }
}

</mosaic_0001>

<llo_original>
// kernel: game_forward.1
$region0: #{game_forward.1}
  #allocation0 [shape = 'u32[]', space=smem, size = 0x4, offset = 0x4, fixed_abs, tag = 'smem constant byte address 0x4 - core index']
  #allocation1 [shape = 'u32[144,128]{1,0:T(1,128)}', space=vmem, size = 0x12000, scoped, tag = 'internal scratch']
  %s0 = inlined_call_operand.vmem [shape: f32[8,20], index: 0, kind: input, shape index: {}]
  %s1 = inlined_call_operand.vmem [shape: s32[8,1], index: 1, kind: input, shape index: {}]
  %s2 = inlined_call_operand.vmem [shape: f32[20,19], index: 2, kind: input, shape index: {}]
  %s3 = inlined_call_operand.vmem [shape: f32[1,19], index: 3, kind: input, shape index: {}]
  %s4 = inlined_call_operand.hbm [shape: f32[8,19], index: 4, kind: output, shape index: {0}]
  %s5 = inlined_call_operand.vmem [shape: f32[8,2], index: 5, kind: output, shape index: {1}]
  %6 = xla_tuple %s4, %s5
  %s7 = sld [smem:[#allocation0]]
  $region34: #{game_forward.1} parent=0
    _
  %s9 = ssub.s32 1, %s7
  %s10 = scalar_select 0, %s9, %s7
  $region1: #{game_forward.1} parent=0
    #allocation2 [shape = 'u8[4096]{0}', space=vmem, size = 0x1000, scoped, tag = 'output window, operand 0, single buffered']
    #allocation3 [shape = 's32[1]{0}', space=sflag, size = 0x4, scoped, tag = 'scoped memory for game_forward.1']
    %11 = vsyncpa [#allocation3], 0
    // Predicated region
    $region2: #{game_forward.1} parent=1 // pred_check
      _
    $region3: #{game_forward.1} parent=1 // pred_check_branch
      %13 = sbr.rel (0) target = $region5
    $region4: #{game_forward.1} parent=1 // pred_region
      _
    $region5: #{game_forward.1} parent=1 // pred_fallthru
      _
    // Predicated region
    $region6: #{game_forward.1} parent=1 // pred_check
      _
    $region7: #{game_forward.1} parent=1 // pred_check_branch
      %15 = sbr.rel (0) target = $region9
    $region8: #{game_forward.1} parent=1 // pred_region
      _
    $region9: #{game_forward.1} parent=1 // pred_fallthru
      _
    // Predicated region
    $region10: #{game_forward.1} parent=1 // pred_check
      _
    $region11: #{game_forward.1} parent=1 // pred_check_branch
      %17 = sbr.rel (0) target = $region13
    $region12: #{game_forward.1} parent=1 // pred_region
      _
    $region13: #{game_forward.1} parent=1 // pred_fallthru
      _
    // Predicated region
    $region14: #{game_forward.1} parent=1 // pred_check
      _
    $region15: #{game_forward.1} parent=1 // pred_check_branch
      %19 = sbr.rel (0) target = $region17
    $region16: #{game_forward.1} parent=1 // pred_region
      _
    $region17: #{game_forward.1} parent=1 // pred_fallthru
      _
    %v20 = vld [vmem:[%s0] sm:$0xff]
    %v21 = vld [vmem:[%s1] sm:$0xff]
    %v22 = vld [vmem:[%s2] sm:$0xff]
    %v23 = vld [vmem:[%s2 + $0x8] sm:$0xff]
    %v24 = vld [vmem:[%s2 + $0x10] sm:$0xf]
    %v25 = vld [vmem:[%s3] sm:$0x1]
    %v27 = vlaneseq
    %v28 = vshrl.u32 %v27, 7
    %v29 = vsub.s32 0, %v28
    %v30 = vrot.slane %v25, %v29
    %vm32 = vcmask 162816
    %v34 = vsel %vm32, %v20, 0
    %vm36 = vcmask 1043456
    %v38 = vsel %vm36, %v24, 0
    %40 = vmatprep.subr.mxu0 0.0
    %41 = vmatpush1.msra.mxu0 %v22
    %42 = vmatprep.subr.mxu0 0.0
    %43 = vmatpush1.msra.mxu0 %v23
    %44 = vmatprep.subr.mxu0 0.0
    %45 = vmatpush1.msra.mxu0 %v38
    %46 = vmatprep.subr.mxu0 0.0
    %47 = vmatpush1.msra.mxu0 0.0
    %48 = vmatprep.subr.mxu0 0.0
    %49 = vmatpush1.msra.mxu0 0.0
    %50 = vmatprep.subr.mxu0 0.0
    %51 = vmatpush1.msra.mxu0 0.0
    %52 = vmatprep.subr.mxu0 0.0
    %53 = vmatpush1.msra.mxu0 0.0
    %54 = vmatprep.subr.mxu0 0.0
    %55 = vmatpush1.msra.mxu0 0.0
    %56 = vmatprep.subr.mxu0 0.0
    %57 = vmatpush1.msra.mxu0 0.0
    %58 = vmatprep.subr.mxu0 0.0
    %59 = vmatpush1.msra.mxu0 0.0
    %60 = vmatprep.subr.mxu0 0.0
    %61 = vmatpush1.msra.mxu0 0.0
    %62 = vmatprep.subr.mxu0 0.0
    %63 = vmatpush1.msra.mxu0 0.0
    %64 = vmatprep.subr.mxu0 0.0
    %65 = vmatpush1.msra.mxu0 0.0
    %66 = vmatprep.subr.mxu0 0.0
    %67 = vmatpush1.msra.mxu0 0.0
    %68 = vmatprep.subr.mxu0 0.0
    %69 = vmatpush1.msra.mxu0 0.0
    %70 = vmatprep.subr.mxu0 0.0
    %71 = vmatpush1.msra.mxu0 0.0
    %72 = vmatprep.subr.mxu0 0.0
    %73 = vmatpush1.msra.mxu0 0.0
    %74 = vmatprep.subr.mxu0 0.0
    %75 = vmatpush1.msra.mxu0 0.0
    %76 = vmatprep.subr.mxu0 0.0
    %77 = vmatpush1.msra.mxu0 0.0
    %78 = vmatprep.subr.mxu0 0.0
    %79 = vmatpush1.msra.mxu0 0.0
    %80 = vmatprep.subr.mxu0 0.0
    %81 = vmatpush1.msra.mxu0 0.0
    %82 = vmatprep.subr.mxu0 0.0
    %83 = vmatpush1.msra.mxu0 0.0
    %84 = vmatprep.subr.mxu0 0.0
    %85 = vmatpush1.msra.mxu0 0.0
    %86 = vmatprep.subr.mxu0 0.0
    %87 = vmatpush1.msra.mxu0 0.0
    %88 = vmatprep.subr.mxu0 0.0
    %89 = vmatpush1.msra.mxu0 0.0
    %90 = vmatprep.subr.mxu0 0.0
    %91 = vmatpush1.msra.mxu0 0.0
    %92 = vmatprep.subr.mxu0 0.0
    %93 = vmatpush1.msra.mxu0 0.0
    %94 = vmatprep.subr.mxu0 0.0
    %95 = vmatpush1.msra.mxu0 0.0
    %96 = vmatprep.subr.mxu0 0.0
    %97 = vmatpush1.msra.mxu0 0.0
    %98 = vmatprep.subr.mxu0 0.0
    %99 = vmatpush1.msra.mxu0 0.0
    %100 = vmatprep.subr.mxu0 0.0
    %101 = vmatpush1.msra.mxu0 0.0
    %102 = vmatprep.subr.mxu0 0.0
    %103 = vmatpush1.msra.mxu0 0.0
    %104 = vmatprep.mubr.f32.mxu0 0.0
    %105 = vmatmul.mubr.f32.gmra.mrb[0].mxu0 %v34
    %v106 = vpop.f32.mrb[0].mxu0
    %v107 = vadd.f32 %v30, %v106
    %v108 = vpop.f32.mrb[0].mxu0
    %109 = vdwg.mxu0
    %vm110 = vcmask 154624
    %111 = vst.msk [vmem:[#allocation2] sm:$0xff] %vm110, %v107
    %v112 = vsel %vm110, %v107, -inf
    %113 = vmax.xlane.f32.xlu0 %v112
    %v114 = vpop.xlane.xlu0 %113
    %v115 = vsub.f32 %v107, %v114
    %v116 = vmul.f32 %v115, 1.442695
    %v117 = vpow.pop %v116
    %v118 = vsel %vm110, %v117, 0.0
    %119 = vadd.xlane.f32.xlu0 %v118
    %v120 = vpop.xlane.xlu0 %119
    %v121 = vlog2.pop %v120
    %v122 = vmul.f32 %v121, 0.6931472
    %v123 = vadd.f32 %v114, %v122
    %v124 = vlaneseq
    %v125 = vand.u32 %v124, 127
    %126 = vset.pattern.permute.xlu0 0
    %127 = vperm.xlu0 %126, %v21
    %v128 = vpop.permute.xlu0 %127
    %vm129 = vcmp.eq.s32.totalorder %v125, %v128
    %v130 = vsel %vm129, 1, 0
    %v131 = vcvt.s32.f32 %v130
    %v132 = vmul.f32 %v107, %v131
    %v133 = vsel %vm110, %v132, 0.0
    %134 = vadd.xlane.f32.xlu0 %v133
    %v135 = vpop.xlane.xlu0 %134
    %v136 = vsub.f32 %v123, %v135
    %vm137 = vcmp.eq.f32.partialorder %v107, %v114
    %v138 = vsel %vm137, %v125, 19
    %v139 = vsel %vm110, %v138, 2147483647
    %v140 = vand.u32 %v139, 65535
    %v141 = vshra.s32 %v139, 16
    %v142 = vcvt.s32.f32 %v140
    %v143 = vcvt.s32.f32 %v141
    %144 = vmin.xlane.f32.xlu0 %v143
    %v145 = vpop.xlane.xlu0 %144
    %vm146 = vcmp.eq.f32.partialorder %v143, %v145
    %v147 = vsel %vm146, %v142, inf
    %148 = vmin.xlane.f32.xlu0 %v147
    %v149 = vpop.xlane.xlu0 %148
    %v150 = vcvt.f32.s32 %v149
    %v151 = vcvt.f32.s32 %v145
    %v152 = vshll.u32 %v151, 16
    %v153 = vadd.s32 %v152, %v150
    %vm154 = vcmp.eq.s32.totalorder %v153, %v21
    %v155 = vsel %vm154, 1, 0
    %v156 = vcvt.s32.f32 %v155
    %vm157 = vcmp.eq.s32.totalorder %v125, 0
    %159 = vset.pattern.permute.xlu0 0
    %160 = vperm.xlu0 %159, %v156
    %v161 = vpop.permute.xlu0 %160
    %v163 = vsel %vm157, %v136, %v161
    %vm164 = vcmask 15360
    %165 = vst.msk [vmem:[%s5] sm:$0xff] %vm164, %v163
    // Predicated region
    $region18: #{game_forward.1} parent=1 // pred_check
      _
    $region19: #{game_forward.1} parent=1 // pred_check_branch
      %167 = sbr.rel (0) target = $region21
    $region20: #{game_forward.1} parent=1 // pred_region
      %s169 = ssub.s32 128, 128
      %170 = vsyncadd [#allocation3], %s169
      %s172 = sshll.u32 [#allocation2], 4
      %s173 = int_to_ptr.vmem [resolvable:$true] %s172
      %175 = dma.vmem_to_hbm [thread:$0]  %s173, 128, %s4, [#allocation3]
    $region21: #{game_forward.1} parent=1 // pred_fallthru
      _
    // Predicated region
    $region22: #{game_forward.1} parent=1 // pred_check
      _
    $region23: #{game_forward.1} parent=1 // pred_check_branch
      %177 = sbr.rel (0) target = $region25
    $region24: #{game_forward.1} parent=1 // pred_region
      _
    $region25: #{game_forward.1} parent=1 // pred_fallthru
      _
    // Predicated region
    $region26: #{game_forward.1} parent=1 // pred_check
      _
    $region27: #{game_forward.1} parent=1 // pred_check_branch
      %179 = sbr.rel (0) target = $region29
    $region28: #{game_forward.1} parent=1 // pred_region
      %180 = dma.done [#allocation3], 128
    $region29: #{game_forward.1} parent=1 // pred_fallthru
      _
    // Predicated region
    $region30: #{game_forward.1} parent=1 // pred_check
      _
    $region31: #{game_forward.1} parent=1 // pred_check_branch
      %182 = sbr.rel (0) target = $region33
    $region32: #{game_forward.1} parent=1 // pred_region
      _
    $region33: #{game_forward.1} parent=1 // pred_fallthru
      _
    %183 = vsyncpa [#allocation3], 1

</llo_original>
